<compile_context>
chip_gen: v7x
topology: tpu7x:2x2x1
jax: 0.10.0
libtpu: 0.0.40
codegen_flags: <defaults>
</compile_context>

<pallas_src>
import jax
import jax.numpy as jnp
from jax.experimental import pallas as pl
from jax.experimental.pallas import tpu as pltpu


def _mlp_t_kernel(x_ref, w1_ref, b1_ref, w2_ref, b2_ref, o_ref):
    # One batch tile, computed transposed (batch on the lane axis).
    x = x_ref[...]                                       # (tb, in)
    # h^T = W1 @ x^T : contract the in_dim axis of both operands
    # (torch-layout W1 is (hidden, in), x block is (tb, in)).
    ht = jax.lax.dot_general(
        w1_ref[...], x, (((1,), (1,)), ((), ())),
        preferred_element_type=jnp.float32)              # (hidden, tb)
    ht = jnp.maximum(ht + b1_ref[...], 0.0)              # bias + ReLU
    # y^T = W2 @ h^T  (torch-layout W2 is (out, hidden)).
    yt = jnp.dot(w2_ref[...], ht,
                 preferred_element_type=jnp.float32)     # (out, tb)
    o_ref[...] = (yt + b2_ref[...]).astype(o_ref.dtype)  # lane-dense store


def _round_up(v: int, m: int) -> int:
    return ((v + m - 1) // m) * m


def net_approximator_forward(x, w1, b1, w2, b2, *, batch_tile: int = 2048):
    """Forward pass of NetApproximator as a single fused Pallas TPU kernel.

    Args:
      x:  (N, input_dim) input, or (input_dim,) which is unsqueezed like
          torch's `_prepare_data`.
      w1: (hidden_dim, input_dim)  torch-layout weight of linear1.
      b1: (hidden_dim,)            bias of linear1.
      w2: (output_dim, hidden_dim) torch-layout weight of linear2.
      b2: (output_dim,)            bias of linear2.

    Returns:
      (N, output_dim) float32 prediction.
    """
    x = jnp.asarray(x, jnp.float32)
    if x.ndim == 1:  # mirrors _prepare_data's unsqueeze(0)
        x = x[None, :]
    n, in_dim = x.shape

    w1 = jnp.asarray(w1, jnp.float32)
    w2 = jnp.asarray(w2, jnp.float32)
    hidden = w1.shape[0]
    out_dim = w2.shape[0]
    # Biases as columns so they broadcast along the lane (batch) axis.
    b1c = jnp.asarray(b1, jnp.float32).reshape(hidden, 1)
    b2c = jnp.asarray(b2, jnp.float32).reshape(out_dim, 1)

    # Lane-aligned batch tile (multiple of 128). Aim for >=2 grid steps for
    # moderate N so v7x's two TensorCores both get work, clamp by batch_tile.
    half = -(-n // 2)  # ceil(n / 2)
    tb = min(int(batch_tile), max(128, _round_up(half, 128)))
    tb = _round_up(tb, 128)

    # Pad only when the whole batch is smaller than one tile; otherwise the
    # single ragged tail block is masked by Pallas (no extra HBM pass).
    n_x = n
    if n < tb:
        x = jnp.pad(x, ((0, tb - n), (0, 0)))
        n_x = tb

    grid = (pl.cdiv(n_x, tb),)

    out_t = pl.pallas_call(
        _mlp_t_kernel,
        out_shape=jax.ShapeDtypeStruct((out_dim, n_x), jnp.float32),
        grid=grid,
        in_specs=[
            # Activations: tiled along batch (sublane axis of the input).
            pl.BlockSpec((tb, in_dim), lambda i: (i, 0)),
            # Weights / biases: whole-array blocks, resident across the grid.
            pl.BlockSpec((hidden, in_dim), lambda i: (0, 0)),
            pl.BlockSpec((hidden, 1), lambda i: (0, 0)),
            pl.BlockSpec((out_dim, hidden), lambda i: (0, 0)),
            pl.BlockSpec((out_dim, 1), lambda i: (0, 0)),
        ],
        # Output is stored transposed (out_dim, N): lane-dense blocks.
        out_specs=pl.BlockSpec((out_dim, tb), lambda i: (0, i)),
        compiler_params=pltpu.CompilerParams(
            dimension_semantics=("parallel",)),
    )(x, w1, b1c, w2, b2c)

    # (out_dim, N) -> (N, out_dim); for out_dim == 1 this is pure layout
    # plumbing (a reshape), no data movement of consequence.
    return out_t[:, :n].T


if __name__ == "__main__":
    key = jax.random.PRNGKey(0)
    k1, k2, k3, k4, k5 = jax.random.split(key, 5)

    # Small shapes consistent with the module:
    # Linear(in->hidden) -> ReLU -> Linear(hidden->out), hidden_dim=32.
    batch, input_dim, hidden_dim, output_dim = 8, 4, 32, 1
    x = jax.random.normal(k1, (batch, input_dim), dtype=jnp.float32)
    w1 = jax.random.normal(k2, (hidden_dim, input_dim), dtype=jnp.float32) * 0.1
    b1 = jax.random.normal(k3, (hidden_dim,), dtype=jnp.float32) * 0.1
    w2 = jax.random.normal(k4, (output_dim, hidden_dim), dtype=jnp.float32) * 0.1
    b2 = jax.random.normal(k5, (output_dim,), dtype=jnp.float32) * 0.1

    y = net_approximator_forward(x, w1, b1, w2, b2)
    y = jax.block_until_ready(y)

    # Pure-JAX reference of the torch forward.
    y_ref = jnp.maximum(x @ w1.T + b1, 0.0) @ w2.T + b2

    assert y.shape == (batch, output_dim), y.shape
    assert y.dtype == jnp.float32
    assert bool(jnp.allclose(y, y_ref, atol=1e-5, rtol=1e-5)), float(
        jnp.max(jnp.abs(y - y_ref)))

    print("KERNEL_OK")
</pallas_src>

<mosaic_0001>
module attributes {stable_mosaic.version = 11 : i64} {
  func.func @_mlp_t_kernel(%arg0: i32, %arg1: memref<128x4xf32, #tpu.memory_space<vmem>>, %arg2: memref<32x4xf32, #tpu.memory_space<vmem>>, %arg3: memref<32x1xf32, #tpu.memory_space<vmem>>, %arg4: memref<1x32xf32, #tpu.memory_space<vmem>>, %arg5: memref<1x1xf32, #tpu.memory_space<vmem>>, %arg6: memref<1x128xf32, #tpu.memory_space<vmem>>) attributes {dimension_semantics = [#tpu.dimension_semantics<parallel>], iteration_bounds = array<i64: 1>, scalar_prefetch = 0 : i64, scratch_operands = 0 : i64, tpu.core_type = #tpu.core_type<tc>, window_params = [{transform_indices = @transform_0, window_bounds = array<i64: 128, 4>}, {pipeline_mode = #tpu.pipeline_mode<synchronous>, transform_indices = @transform_1, window_bounds = array<i64: 32, 4>}, {pipeline_mode = #tpu.pipeline_mode<synchronous>, transform_indices = @transform_2, window_bounds = array<i64: 32, 1>}, {pipeline_mode = #tpu.pipeline_mode<synchronous>, transform_indices = @transform_3, window_bounds = array<i64: 1, 32>}, {pipeline_mode = #tpu.pipeline_mode<synchronous>, transform_indices = @transform_4, window_bounds = array<i64: 1, 1>}, {transform_indices = @transform_5, window_bounds = array<i64: 1, 128>}]} {
    %c0 = arith.constant 0 : index
    %c0_0 = arith.constant 0 : index
    %0 = vector.load %arg1[%c0, %c0_0] : memref<128x4xf32, #tpu.memory_space<vmem>>, vector<128x4xf32>
    %c0_1 = arith.constant 0 : index
    %c0_2 = arith.constant 0 : index
    %1 = vector.load %arg2[%c0_1, %c0_2] : memref<32x4xf32, #tpu.memory_space<vmem>>, vector<32x4xf32>
    %cst = arith.constant dense<0.000000e+00> : vector<32x128xf32>
    %2 = tpu.matmul %1, %0, %cst {dimension_numbers = #tpu.dot_dimension_numbers<[1], [1], [0], [0], [0, 0, 1, 0], [], []>} : vector<32x4xf32>, vector<128x4xf32>, vector<32x128xf32> -> vector<32x128xf32>
    %c0_3 = arith.constant 0 : index
    %c0_4 = arith.constant 0 : index
    %3 = vector.load %arg3[%c0_3, %c0_4] : memref<32x1xf32, #tpu.memory_space<vmem>>, vector<32x1xf32>
    %4 = vector.broadcast %3 : vector<32x1xf32> to vector<32x128xf32>
    %5 = arith.addf %2, %4 : vector<32x128xf32>
    %cst_5 = arith.constant 0.000000e+00 : f32
    %6 = vector.broadcast %cst_5 : f32 to vector<32x128xf32>
    %7 = arith.maximumf %5, %6 : vector<32x128xf32>
    %c0_6 = arith.constant 0 : index
    %c0_7 = arith.constant 0 : index
    %8 = vector.load %arg4[%c0_6, %c0_7] : memref<1x32xf32, #tpu.memory_space<vmem>>, vector<1x32xf32>
    %cst_8 = arith.constant dense<0.000000e+00> : vector<1x128xf32>
    %9 = tpu.matmul %8, %7, %cst_8 {dimension_numbers = #tpu.dot_dimension_numbers<[1], [0], [0], [1], [0, 0, 1, 1], [], []>} : vector<1x32xf32>, vector<32x128xf32>, vector<1x128xf32> -> vector<1x128xf32>
    %c0_9 = arith.constant 0 : index
    %c0_10 = arith.constant 0 : index
    %10 = vector.load %arg5[%c0_9, %c0_10] : memref<1x1xf32, #tpu.memory_space<vmem>>, vector<1x1xf32>
    %11 = vector.broadcast %10 : vector<1x1xf32> to vector<1x128xf32>
    %12 = arith.addf %9, %11 : vector<1x128xf32>
    %c0_11 = arith.constant 0 : index
    %c0_12 = arith.constant 0 : index
    %13 = vector.load %arg6[%c0_11, %c0_12] : memref<1x128xf32, #tpu.memory_space<vmem>>, vector<1x128xf32>
    tpu.vector_store %arg6[%c0_11, %c0_12], %12 {strides = array<i32>} : memref<1x128xf32, #tpu.memory_space<vmem>>, vector<1x128xf32>,
    return
  }
  func.func @transform_0(%arg0: i32) -> (i32, i32) {
    %c0_i32 = arith.constant 0 : i32
    %c0_i32_0 = arith.constant 0 : i32
    return %arg0, %c0_i32 : i32, i32
  }
  func.func @transform_1(%arg0: i32) -> (i32, i32) {
    %c0_i32 = arith.constant 0 : i32
    %c0_i32_0 = arith.constant 0 : i32
    %c0_i32_1 = arith.constant 0 : i32
    return %c0_i32, %c0_i32_0 : i32, i32
  }
  func.func @transform_2(%arg0: i32) -> (i32, i32) {
    %c0_i32 = arith.constant 0 : i32
    %c0_i32_0 = arith.constant 0 : i32
    %c0_i32_1 = arith.constant 0 : i32
    return %c0_i32, %c0_i32_0 : i32, i32
  }
  func.func @transform_3(%arg0: i32) -> (i32, i32) {
    %c0_i32 = arith.constant 0 : i32
    %c0_i32_0 = arith.constant 0 : i32
    %c0_i32_1 = arith.constant 0 : i32
    return %c0_i32, %c0_i32_0 : i32, i32
  }
  func.func @transform_4(%arg0: i32) -> (i32, i32) {
    %c0_i32 = arith.constant 0 : i32
    %c0_i32_0 = arith.constant 0 : i32
    %c0_i32_1 = arith.constant 0 : i32
    return %c0_i32, %c0_i32_0 : i32, i32
  }
  func.func @transform_5(%arg0: i32) -> (i32, i32) {
    %c0_i32 = arith.constant 0 : i32
    %c0_i32_0 = arith.constant 0 : i32
    return %c0_i32, %arg0 : i32, i32
  }
}

</mosaic_0001>

<llo_original>
// kernel: tpu_custom_call.1
$region0: #{tpu_custom_call.1}
  #allocation0 [shape = 'u32[]', space=smem, size = 0x4, offset = 0x4, fixed_abs, tag = 'smem constant byte address 0x4 - core index']
  #allocation1 [shape = 'u32[144,128]{1,0:T(1,128)}', space=vmem, size = 0x12000, scoped, tag = 'internal scratch']
  #allocation2 [shape = 'f32[1,1]{1,0:T(1,128)S(1)}', space=vmem, size = 0x200, scoped, tag = 'scoped memory for tpu_custom_call.1']
  %s0 = inlined_call_operand.vmem [shape: f32[128,4], index: 0, kind: input, shape index: {}]
  %s1 = inlined_call_operand.vmem [shape: f32[32,4], index: 1, kind: input, shape index: {}]
  %s2 = inlined_call_operand.vmem [shape: f32[32,1], index: 2, kind: input, shape index: {}]
  %s3 = inlined_call_operand.vmem [shape: f32[1,32], index: 3, kind: input, shape index: {}]
  %s4 = inlined_call_operand.<no memory space> [shape: f32[1,1], index: 4, kind: input, shape index: {}]
  %s5 = inlined_call_operand.hbm [shape: f32[1,128], index: 5, kind: output, shape index: {}]
  %s6 = sld [smem:[#allocation0]]
  $region30: #{tpu_custom_call.1} parent=0
    _
  %s8 = ssub.s32 1, %s6
  %s9 = scalar_select 0, %s8, %s6
  %v10 = vstv %s4
  %11 = vst [vmem:[#allocation2] sm:$0x1] %v10
  $region1: #{tpu_custom_call.1} parent=0
    #allocation3 [shape = 'u8[512]{0}', space=vmem, size = 0x400, scoped, tag = 'output window, operand 0, single buffered']
    #allocation4 [shape = 's32[1]{0}', space=sflag, size = 0x4, scoped, tag = 'scoped memory for tpu_custom_call.1']
    %12 = vsyncpa [#allocation4], 0
    // Predicated region
    $region2: #{tpu_custom_call.1} parent=1 // pred_check
      _
    $region3: #{tpu_custom_call.1} parent=1 // pred_check_branch
      %14 = sbr.rel (0) target = $region5
    $region4: #{tpu_custom_call.1} parent=1 // pred_region
      _
    $region5: #{tpu_custom_call.1} parent=1 // pred_fallthru
      _
    // Predicated region
    $region6: #{tpu_custom_call.1} parent=1 // pred_check
      _
    $region7: #{tpu_custom_call.1} parent=1 // pred_check_branch
      %16 = sbr.rel (0) target = $region9
    $region8: #{tpu_custom_call.1} parent=1 // pred_region
      _
    $region9: #{tpu_custom_call.1} parent=1 // pred_fallthru
      _
    // Predicated region
    $region10: #{tpu_custom_call.1} parent=1 // pred_check
      _
    $region11: #{tpu_custom_call.1} parent=1 // pred_check_branch
      %18 = sbr.rel (0) target = $region13
    $region12: #{tpu_custom_call.1} parent=1 // pred_region
      _
    $region13: #{tpu_custom_call.1} parent=1 // pred_fallthru
      _
    // Predicated region
    $region14: #{tpu_custom_call.1} parent=1 // pred_check
      _
    $region15: #{tpu_custom_call.1} parent=1 // pred_check_branch
      %20 = sbr.rel (0) target = $region17
    $region16: #{tpu_custom_call.1} parent=1 // pred_region
      _
    $region17: #{tpu_custom_call.1} parent=1 // pred_fallthru
      _
    // Predicated region
    $region18: #{tpu_custom_call.1} parent=1 // pred_check
      _
    $region19: #{tpu_custom_call.1} parent=1 // pred_check_branch
      %22 = sbr.rel (0) target = $region21
    $region20: #{tpu_custom_call.1} parent=1 // pred_region
      _
    $region21: #{tpu_custom_call.1} parent=1 // pred_fallthru
      _
    %v23 = vld [vmem:[%s0] sm:$0xff]
    %v24 = vld [vmem:[%s0 + $0x8] sm:$0xff]
    %v25 = vld [vmem:[%s0 + $0x10] sm:$0xff]
    %v26 = vld [vmem:[%s0 + $0x18] sm:$0xff]
    %v27 = vld [vmem:[%s0 + $0x20] sm:$0xff]
    %v28 = vld [vmem:[%s0 + $0x28] sm:$0xff]
    %v29 = vld [vmem:[%s0 + $0x30] sm:$0xff]
    %v30 = vld [vmem:[%s0 + $0x38] sm:$0xff]
    %v31 = vld [vmem:[%s0 + $0x40] sm:$0xff]
    %v32 = vld [vmem:[%s0 + $0x48] sm:$0xff]
    %v33 = vld [vmem:[%s0 + $0x50] sm:$0xff]
    %v34 = vld [vmem:[%s0 + $0x58] sm:$0xff]
    %v35 = vld [vmem:[%s0 + $0x60] sm:$0xff]
    %v36 = vld [vmem:[%s0 + $0x68] sm:$0xff]
    %v37 = vld [vmem:[%s0 + $0x70] sm:$0xff]
    %v38 = vld [vmem:[%s0 + $0x78] sm:$0xff]
    %v39 = vld [vmem:[%s1] sm:$0xff]
    %v40 = vld [vmem:[%s1 + $0x8] sm:$0xff]
    %v41 = vld [vmem:[%s1 + $0x10] sm:$0xff]
    %v42 = vld [vmem:[%s1 + $0x18] sm:$0xff]
    %v43 = vld [vmem:[%s2] sm:$0xff]
    %v44 = vld [vmem:[%s2 + $0x8] sm:$0xff]
    %v45 = vld [vmem:[%s2 + $0x10] sm:$0xff]
    %v46 = vld [vmem:[%s2 + $0x18] sm:$0xff]
    %48 = vset.pattern.permute.xlu0 0
    %49 = vperm.xlu0 %48, %v43
    %v50 = vpop.permute.xlu0 %49
    %53 = vset.pattern.permute.xlu0 0
    %54 = vperm.xlu0 %53, %v44
    %v55 = vpop.permute.xlu0 %54
    %58 = vset.pattern.permute.xlu0 0
    %59 = vperm.xlu0 %58, %v45
    %v60 = vpop.permute.xlu0 %59
    %63 = vset.pattern.permute.xlu0 0
    %64 = vperm.xlu0 %63, %v46
    %v65 = vpop.permute.xlu0 %64
    %vm67 = vcmask 31744
    %v69 = vsel %vm67, %v39, 0
    %v72 = vsel %vm67, %v40, 0
    %v75 = vsel %vm67, %v41, 0
    %v78 = vsel %vm67, %v42, 0
    %v81 = vsel %vm67, %v23, 0
    %v84 = vsel %vm67, %v24, 0
    %v87 = vsel %vm67, %v25, 0
    %v90 = vsel %vm67, %v26, 0
    %v93 = vsel %vm67, %v27, 0
    %v96 = vsel %vm67, %v28, 0
    %v99 = vsel %vm67, %v29, 0
    %v102 = vsel %vm67, %v30, 0
    %v105 = vsel %vm67, %v31, 0
    %v108 = vsel %vm67, %v32, 0
    %v111 = vsel %vm67, %v33, 0
    %v114 = vsel %vm67, %v34, 0
    %v117 = vsel %vm67, %v35, 0
    %v120 = vsel %vm67, %v36, 0
    %v123 = vsel %vm67, %v37, 0
    %v126 = vsel %vm67, %v38, 0
    %128 = vmatprep.subr.mxu0 0.0
    %129 = vmatpush1.xpose.msra.mxu0 %v81
    %130 = vmatprep.subr.mxu0 0.0
    %131 = vmatpush1.xpose.msra.mxu0 %v84
    %132 = vmatprep.subr.mxu0 0.0
    %133 = vmatpush1.xpose.msra.mxu0 %v87
    %134 = vmatprep.subr.mxu0 0.0
    %135 = vmatpush1.xpose.msra.mxu0 %v90
    %136 = vmatprep.subr.mxu0 0.0
    %137 = vmatpush1.xpose.msra.mxu0 %v93
    %138 = vmatprep.subr.mxu0 0.0
    %139 = vmatpush1.xpose.msra.mxu0 %v96
    %140 = vmatprep.subr.mxu0 0.0
    %141 = vmatpush1.xpose.msra.mxu0 %v99
    %142 = vmatprep.subr.mxu0 0.0
    %143 = vmatpush1.xpose.msra.mxu0 %v102
    %144 = vmatprep.subr.mxu0 0.0
    %145 = vmatpush1.xpose.msra.mxu0 %v105
    %146 = vmatprep.subr.mxu0 0.0
    %147 = vmatpush1.xpose.msra.mxu0 %v108
    %148 = vmatprep.subr.mxu0 0.0
    %149 = vmatpush1.xpose.msra.mxu0 %v111
    %150 = vmatprep.subr.mxu0 0.0
    %151 = vmatpush1.xpose.msra.mxu0 %v114
    %152 = vmatprep.subr.mxu0 0.0
    %153 = vmatpush1.xpose.msra.mxu0 %v117
    %154 = vmatprep.subr.mxu0 0.0
    %155 = vmatpush1.xpose.msra.mxu0 %v120
    %156 = vmatprep.subr.mxu0 0.0
    %157 = vmatpush1.xpose.msra.mxu0 %v123
    %158 = vmatprep.subr.mxu0 0.0
    %159 = vmatpush1.xpose.msra.mxu0 %v126
    %160 = vmatprep.subr.mxu0 0.0
    %161 = vmatpush1.xpose.msra.mxu0 0.0
    %162 = vmatprep.subr.mxu0 0.0
    %163 = vmatpush1.xpose.msra.mxu0 0.0
    %164 = vmatprep.subr.mxu0 0.0
    %165 = vmatpush1.xpose.msra.mxu0 0.0
    %166 = vmatprep.subr.mxu0 0.0
    %167 = vmatpush1.xpose.msra.mxu0 0.0
    %168 = vmatprep.subr.mxu0 0.0
    %169 = vmatpush1.xpose.msra.mxu0 0.0
    %170 = vmatprep.subr.mxu0 0.0
    %171 = vmatpush1.xpose.msra.mxu0 0.0
    %172 = vmatprep.subr.mxu0 0.0
    %173 = vmatpush1.xpose.msra.mxu0 0.0
    %174 = vmatprep.subr.mxu0 0.0
    %175 = vmatpush1.xpose.msra.mxu0 0.0
    %176 = vmatprep.subr.mxu0 0.0
    %177 = vmatpush1.xpose.msra.mxu0 0.0
    %178 = vmatprep.subr.mxu0 0.0
    %179 = vmatpush1.xpose.msra.mxu0 0.0
    %180 = vmatprep.subr.mxu0 0.0
    %181 = vmatpush1.xpose.msra.mxu0 0.0
    %182 = vmatprep.subr.mxu0 0.0
    %183 = vmatpush1.xpose.msra.mxu0 0.0
    %184 = vmatprep.subr.mxu0 0.0
    %185 = vmatpush1.xpose.msra.mxu0 0.0
    %186 = vmatprep.subr.mxu0 0.0
    %187 = vmatpush1.xpose.msra.mxu0 0.0
    %188 = vmatprep.subr.mxu0 0.0
    %189 = vmatpush1.xpose.msra.mxu0 0.0
    %190 = vmatprep.subr.mxu0 0.0
    %191 = vmatpush1.xpose.msra.mxu0 0.0
    %192 = vmatprep.mubr.f32.mxu0 0.0
    %193 = vmatmul.mubr.f32.gmra.mrb[0].mxu0 %v69
    %v194 = vpop.f32.mrb[0].mxu0
    %v195 = vadd.f32 %v50, %v194
    %v196 = vpop.f32.mrb[0].mxu0
    %197 = vmatprep.mubr.f32.mxu0 0.0
    %198 = vmatmul.mubr.f32.gmra.mrb[0].mxu0 %v72
    %v199 = vpop.f32.mrb[0].mxu0
    %v200 = vadd.f32 %v55, %v199
    %v201 = vpop.f32.mrb[0].mxu0
    %202 = vmatprep.mubr.f32.mxu0 0.0
    %203 = vmatmul.mubr.f32.gmra.mrb[0].mxu0 %v75
    %v204 = vpop.f32.mrb[0].mxu0
    %v205 = vadd.f32 %v60, %v204
    %v206 = vpop.f32.mrb[0].mxu0
    %207 = vmatprep.mubr.f32.mxu0 0.0
    %208 = vmatmul.mubr.f32.gmra.mrb[0].mxu0 %v78
    %v209 = vpop.f32.mrb[0].mxu0
    %v210 = vadd.f32 %v65, %v209
    %v211 = vpop.f32.mrb[0].mxu0
    %212 = vdwg.mxu0
    %v213 = vmax.f32 %v195, 0.0
    %v214 = vmax.f32 %v200, 0.0
    %v215 = vmax.f32 %v205, 0.0
    %v216 = vmax.f32 %v210, 0.0
    %v217 = vld [vmem:[%s3] sm:$0x1]
    %v218 = vld [vmem:[#allocation2] sm:$0x1]
    %220 = vset.pattern.permute.xlu0 0
    %221 = vperm.xlu0 %220, %v218
    %v222 = vpop.permute.xlu0 %221
    %v224 = vlaneseq
    %v225 = vshrl.u32 %v224, 7
    %v226 = vsub.s32 0, %v225
    %v227 = vrot.slane %v222, %v226
    %vm228 = vcmask 261120
    %v230 = vsel %vm228, %v217, 0
    %232 = vmatprep.subr.mxu0 0.0
    %233 = vmatpush1.msra.mxu0 %v213
    %234 = vmatprep.subr.mxu0 0.0
    %235 = vmatpush1.msra.mxu0 %v214
    %236 = vmatprep.subr.mxu0 0.0
    %237 = vmatpush1.msra.mxu0 %v215
    %238 = vmatprep.subr.mxu0 0.0
    %239 = vmatpush1.msra.mxu0 %v216
    %240 = vmatprep.subr.mxu0 0.0
    %241 = vmatpush1.msra.mxu0 0.0
    %242 = vmatprep.subr.mxu0 0.0
    %243 = vmatpush1.msra.mxu0 0.0
    %244 = vmatprep.subr.mxu0 0.0
    %245 = vmatpush1.msra.mxu0 0.0
    %246 = vmatprep.subr.mxu0 0.0
    %247 = vmatpush1.msra.mxu0 0.0
    %248 = vmatprep.subr.mxu0 0.0
    %249 = vmatpush1.msra.mxu0 0.0
    %250 = vmatprep.subr.mxu0 0.0
    %251 = vmatpush1.msra.mxu0 0.0
    %252 = vmatprep.subr.mxu0 0.0
    %253 = vmatpush1.msra.mxu0 0.0
    %254 = vmatprep.subr.mxu0 0.0
    %255 = vmatpush1.msra.mxu0 0.0
    %256 = vmatprep.subr.mxu0 0.0
    %257 = vmatpush1.msra.mxu0 0.0
    %258 = vmatprep.subr.mxu0 0.0
    %259 = vmatpush1.msra.mxu0 0.0
    %260 = vmatprep.subr.mxu0 0.0
    %261 = vmatpush1.msra.mxu0 0.0
    %262 = vmatprep.subr.mxu0 0.0
    %263 = vmatpush1.msra.mxu0 0.0
    %264 = vmatprep.subr.mxu0 0.0
    %265 = vmatpush1.msra.mxu0 0.0
    %266 = vmatprep.subr.mxu0 0.0
    %267 = vmatpush1.msra.mxu0 0.0
    %268 = vmatprep.subr.mxu0 0.0
    %269 = vmatpush1.msra.mxu0 0.0
    %270 = vmatprep.subr.mxu0 0.0
    %271 = vmatpush1.msra.mxu0 0.0
    %272 = vmatprep.subr.mxu0 0.0
    %273 = vmatpush1.msra.mxu0 0.0
    %274 = vmatprep.subr.mxu0 0.0
    %275 = vmatpush1.msra.mxu0 0.0
    %276 = vmatprep.subr.mxu0 0.0
    %277 = vmatpush1.msra.mxu0 0.0
    %278 = vmatprep.subr.mxu0 0.0
    %279 = vmatpush1.msra.mxu0 0.0
    %280 = vmatprep.subr.mxu0 0.0
    %281 = vmatpush1.msra.mxu0 0.0
    %282 = vmatprep.subr.mxu0 0.0
    %283 = vmatpush1.msra.mxu0 0.0
    %284 = vmatprep.subr.mxu0 0.0
    %285 = vmatpush1.msra.mxu0 0.0
    %286 = vmatprep.subr.mxu0 0.0
    %287 = vmatpush1.msra.mxu0 0.0
    %288 = vmatprep.subr.mxu0 0.0
    %289 = vmatpush1.msra.mxu0 0.0
    %290 = vmatprep.subr.mxu0 0.0
    %291 = vmatpush1.msra.mxu0 0.0
    %292 = vmatprep.subr.mxu0 0.0
    %293 = vmatpush1.msra.mxu0 0.0
    %294 = vmatprep.subr.mxu0 0.0
    %295 = vmatpush1.msra.mxu0 0.0
    %296 = vmatprep.mubr.f32.mxu0 0.0
    %297 = vmatmul.mubr.f32.gmra.mrb[0].mxu0 %v230
    %v298 = vpop.f32.mrb[0].mxu0
    %v299 = vadd.f32 %v227, %v298
    %v300 = vpop.f32.mrb[0].mxu0
    %301 = vdwg.mxu0
    %302 = vst [vmem:[#allocation3] sm:$0x1] %v299
    // Predicated region
    $region22: #{tpu_custom_call.1} parent=1 // pred_check
      _
    $region23: #{tpu_custom_call.1} parent=1 // pred_check_branch
      %304 = sbr.rel (0) target = $region25
    $region24: #{tpu_custom_call.1} parent=1 // pred_region
      %s306 = ssub.s32 16, 16
      %307 = vsyncadd [#allocation4], %s306
      %s309 = sshll.u32 [#allocation3], 4
      %s310 = int_to_ptr.vmem [resolvable:$true] %s309
      %312 = dma.vmem_to_hbm [thread:$0]  %s310, 16, %s5, [#allocation4]
    $region25: #{tpu_custom_call.1} parent=1 // pred_fallthru
      _
    // Predicated region
    $region26: #{tpu_custom_call.1} parent=1 // pred_check
      _
    $region27: #{tpu_custom_call.1} parent=1 // pred_check_branch
      %314 = sbr.rel (0) target = $region29
    $region28: #{tpu_custom_call.1} parent=1 // pred_region
      %315 = dma.done [#allocation4], 16
    $region29: #{tpu_custom_call.1} parent=1 // pred_fallthru
      _
    %316 = vsyncpa [#allocation4], 1

</llo_original>
